<compile_context>
chip_gen: v7x
topology: tpu7x:2x2x1
jax: 0.10.0
libtpu: 0.0.40
codegen_flags: <defaults>
</compile_context>

<pallas_src>
import functools

import jax
import jax.numpy as jnp
from jax.experimental import pallas as pl
from jax.experimental.pallas import tpu as pltpu

LEAKY_SLOPE = 1.0 / 5.5
BN_EPS = 1e-5


@functools.lru_cache(maxsize=None)
def _device_kind():
    try:
        return jax.devices()[0].device_kind.lower()
    except Exception:
        return ""


@functools.lru_cache(maxsize=None)
def _vmem_limit_bytes():
    """Generation-aware VMEM cap: ~100 MiB on v5e/v6e (128 MiB physical),
    ~56 MiB on v7x (64 MiB physical), conservative when unknown."""
    cap = None
    try:
        cap = int(pltpu.get_tpu_info().vmem_capacity_bytes)
    except Exception:
        cap = None
    if not cap:
        kind = _device_kind()
        cap = 128 * 1024 * 1024 if ("v5" in kind or "v6" in kind) else 64 * 1024 * 1024
    return int(max(32 * 1024 * 1024,
                   min(cap - 8 * 1024 * 1024, 100 * 1024 * 1024)))


@functools.lru_cache(maxsize=None)
def _block_target():
    """256-row weight blocks on 256-wide-MXU chips (v6e/v7x), 128 on v5e."""
    kind = _device_kind()
    return 256 if ("v6" in kind or "v7" in kind or "7x" in kind) else 128


def _pick_block(cout, target, min_mult=8):
    """Largest output-channel block that (a) tiles cout, (b) is a multiple of
    `min_mult` (8 for f32, 16 for bf16 sublane packing) or the full dim,
    (c) is <= target, and (d) leaves >= 2 grid steps whenever cout allows it,
    so the "parallel" grid axis can be sharded across v7x's two TensorCores."""
    if cout % min_mult != 0:
        return cout                       # odd channel count: single full block
    cap = min(target, cout)
    if cout // 2 >= min_mult:
        cap = min(cap, cout // 2)         # keep the grid >= 2 steps (megacore)
    for t in range(cap, min_mult - 1, -1):
        if t % min_mult == 0 and cout % t == 0:
            return t
    return cout


def _conv_bn_lrelu_kernel(x_ref, w_ref, gb_ref, o_ref, *, n):
    """Fused Conv1d(k=3, valid) + BatchNorm1d(train) + LeakyReLU(1/5.5).

    Layout: activations are channels-major with (length, batch) flattened into
    the lane axis -- column j of x corresponds to (l, b) = (j // n, j % n) --
    so a conv shift of +k along length is a static lane offset of k*n.

    x_ref : (Cin, Lin*N)   full activation, VMEM-resident (single-buffered).
    w_ref : (TC, 3*Cin)    tap-major weight block for this step's out-channels.
    gb_ref: (TC, 2)        [:, 0] = BN gamma, [:, 1] = BN beta (f32).
    o_ref : (TC, Lout*N)   lane-dense output block.
    """
    cin = x_ref.shape[0]
    lout_n = x_ref.shape[1] - 2 * n

    # 3-tap conv as three accumulating MXU matmuls on lane-shifted views
    # (no im2col concat, no (3*Cin, Lout*N) scratch; v7x accumulates in MRB).
    y = jnp.dot(w_ref[:, 0:cin], x_ref[:, 0:lout_n],
                preferred_element_type=jnp.float32)
    y += jnp.dot(w_ref[:, cin:2 * cin], x_ref[:, n:n + lout_n],
                 preferred_element_type=jnp.float32)
    y += jnp.dot(w_ref[:, 2 * cin:3 * cin], x_ref[:, 2 * n:2 * n + lout_n],
                 preferred_element_type=jnp.float32)           # (TC, Lout*N) f32

    # BatchNorm1d training-mode stats over (N, L) == the lane axis here.
    # Conv bias is omitted upstream: the mean subtraction cancels it exactly.
    # TODO(synk): for production C*L*N sizes add a lane-tile grid axis
    # ("arbitrary") with two-pass sum/sumsq accumulation so the activation need
    # not be fully VMEM-resident on v7x (64 MiB) and stats accumulate tiled.
    inv_cnt = 1.0 / float(lout_n)
    mean = jnp.sum(y, axis=1, keepdims=True) * inv_cnt                  # (TC, 1)
    var = jnp.sum(y * y, axis=1, keepdims=True) * inv_cnt - mean * mean
    var = jnp.maximum(var, 0.0)           # rounding guard -> no NaN from rsqrt
    gamma = gb_ref[:, 0:1]
    beta = gb_ref[:, 1:2]
    scale = gamma * jax.lax.rsqrt(var + BN_EPS)                         # (TC, 1)
    shift = beta - mean * scale                                         # (TC, 1)

    z = y * scale + shift                                               # fused BN
    # LeakyReLU with slope in (0, 1): max(z, slope*z) == where(z>=0, z, slope*z)
    o_ref[...] = jnp.maximum(z, LEAKY_SLOPE * z).astype(o_ref.dtype)


def _conv_bn_lrelu(x_cln, w2d, gb, *, n, block_c, out_dtype):
    """pallas_call for one stage, gridded over output-channel blocks."""
    cin, lin_n = x_cln.shape
    cout = w2d.shape[0]
    lout_n = lin_n - 2 * n
    grid = (cout // block_c,)

    kernel = functools.partial(_conv_bn_lrelu_kernel, n=n)

    return pl.pallas_call(
        kernel,
        out_shape=jax.ShapeDtypeStruct((cout, lout_n), out_dtype),
        grid_spec=pltpu.PrefetchScalarGridSpec(
            num_scalar_prefetch=0,
            grid=grid,
            in_specs=[
                # Full activation, identical block every step -> VMEM-resident;
                # Buffered(1): don't double-buffer the largest input.
                pl.BlockSpec((cin, lin_n), lambda i: (0, 0),
                             pipeline_mode=pl.Buffered(1)),
                pl.BlockSpec((block_c, 3 * cin), lambda i: (i, 0)),
                pl.BlockSpec((block_c, 2), lambda i: (i, 0)),
            ],
            out_specs=pl.BlockSpec((block_c, lout_n), lambda i: (i, 0)),
        ),
        compiler_params=pltpu.CompilerParams(
            dimension_semantics=("parallel",),
            vmem_limit_bytes=_vmem_limit_bytes(),
        ),
    )(x_cln, w2d, gb)


def down_scale(x, params, *, compute_dtype=jnp.float32, block_c=None):
    """Forward pass of Down_Scale (training-mode BatchNorm semantics)."""
    n, cin, l = x.shape
    lp = l // 2
    if lp - 4 < 1:
        raise ValueError(f"input length {l} too short for MaxPool(2) + 2x Conv1d(k=3)")
    cout = params["w1"].shape[0]
    op_dtype = jnp.dtype(compute_dtype)

    # MaxPool1d(2) (floor length) + transpose to channels-major/length-major
    # (+ cast to the MXU dtype at the HBM boundary), fused by XLA in the
    # wrapper so the kernels ingest a lane-dense (Cin, Lp*N) slab at half
    # (quarter, in bf16) the original activation bytes.
    xp = jnp.max(x[:, :, : 2 * lp].reshape(n, cin, lp, 2), axis=-1)      # (N,Cin,Lp)
    x_cln = jnp.transpose(xp, (1, 2, 0)).reshape(cin, lp * n).astype(op_dtype)

    # Conv weights (Cout, Cin, 3) -> tap-major (Cout, 3*Cin) in the MXU dtype.
    w1 = jnp.transpose(params["w1"], (0, 2, 1)).reshape(cout, 3 * cin).astype(op_dtype)
    w2 = jnp.transpose(params["w2"], (0, 2, 1)).reshape(cout, 3 * cout).astype(op_dtype)
    # NOTE: conv biases b1/b2 are intentionally not passed -- train-mode BN
    # subtracts the batch mean right after the conv, cancelling them exactly.

    gb1 = jnp.stack([params["g1"], params["be1"]], axis=1)               # (Cout,2) f32
    gb2 = jnp.stack([params["g2"], params["be2"]], axis=1)

    min_mult = 8 * (4 // op_dtype.itemsize)                 # 8 for f32, 16 for bf16
    bc = _pick_block(cout, block_c if block_c is not None else _block_target(),
                     min_mult=min_mult)

    # Stage 1 emits the intermediate in the compute dtype (bf16 on the fast
    # path) so stage 2 ingests half-width HBM bytes; stage 2 emits f32.
    y1 = _conv_bn_lrelu(x_cln, w1, gb1, n=n, block_c=bc, out_dtype=op_dtype)
    y2 = _conv_bn_lrelu(y1, w2, gb2, n=n, block_c=bc, out_dtype=jnp.float32)

    # Back to the module's NCL layout.
    return jnp.transpose(y2.reshape(cout, lp - 4, n), (2, 0, 1))         # (N,Cout,Lp-4)


def init_params(key, in_channels, out_channels):
    ks = jax.random.split(key, 4)
    s1 = 1.0 / jnp.sqrt(in_channels * 3.0)
    s2 = 1.0 / jnp.sqrt(out_channels * 3.0)
    return {
        "w1": jax.random.uniform(ks[0], (out_channels, in_channels, 3),
                                 jnp.float32, -s1, s1),
        "b1": jax.random.uniform(ks[1], (out_channels,), jnp.float32, -s1, s1),
        "g1": jnp.ones((out_channels,), jnp.float32),
        "be1": jnp.zeros((out_channels,), jnp.float32),
        "w2": jax.random.uniform(ks[2], (out_channels, out_channels, 3),
                                 jnp.float32, -s2, s2),
        "b2": jax.random.uniform(ks[3], (out_channels,), jnp.float32, -s2, s2),
        "g2": jnp.ones((out_channels,), jnp.float32),
        "be2": jnp.zeros((out_channels,), jnp.float32),
    }


def ref_forward(x, p):
    """Plain-JAX reference faithful to the PyTorch module (biases included)."""
    n, c, l = x.shape
    xp = jnp.max(x[:, :, : 2 * (l // 2)].reshape(n, c, l // 2, 2), axis=-1)

    def conv(h, w, b):
        lout = h.shape[-1] - 2
        out = sum(jnp.einsum("oc,ncl->nol", w[:, :, k], h[:, :, k:k + lout])
                  for k in range(3))
        return out + b.reshape(1, -1, 1)

    def bn(h, g, be):
        m = jnp.mean(h, axis=(0, 2), keepdims=True)
        v = jnp.mean((h - m) ** 2, axis=(0, 2), keepdims=True)
        return (h - m) / jnp.sqrt(v + BN_EPS) * g.reshape(1, -1, 1) + be.reshape(1, -1, 1)

    def lrelu(h):
        return jnp.where(h >= 0, h, LEAKY_SLOPE * h)

    h = lrelu(bn(conv(xp, p["w1"], p["b1"]), p["g1"], p["be1"]))
    h = lrelu(bn(conv(h, p["w2"], p["b2"]), p["g2"], p["be2"]))
    return h


if __name__ == "__main__":
    key = jax.random.PRNGKey(0)
    kx, kp = jax.random.split(key)

    N, Cin, Cout, L = 2, 4, 16, 16                 # output: (2, 16, 4)
    x = jax.random.normal(kx, (N, Cin, L), jnp.float32)
    params = init_params(kp, Cin, Cout)

    # f32 MXU path (block picker -> block_c=8, so the channel grid has 2 steps).
    f32_fn = jax.jit(functools.partial(down_scale, compute_dtype=jnp.float32))
    out = jax.block_until_ready(f32_fn(x, params))

    ref = ref_forward(x, params)
    assert out.shape == (N, Cout, L // 2 - 4), out.shape
    assert bool(jnp.all(jnp.isfinite(out))), "non-finite f32 output"
    assert jnp.allclose(out, ref, atol=1e-4, rtol=1e-4), "f32 mismatch vs reference"

    # bf16 operands + bf16 inter-stage activation (v6e/v7x fast path);
    # element-wise BN/LReLU math stays f32.  Tolerance is loose because the
    # f32 reference does not model the bf16 quantisation of the intermediate.
    bf16_fn = jax.jit(functools.partial(down_scale, compute_dtype=jnp.bfloat16))
    out_bf16 = jax.block_until_ready(bf16_fn(x, params))
    assert out_bf16.shape == out.shape
    assert bool(jnp.all(jnp.isfinite(out_bf16))), "non-finite bf16 output"
    assert jnp.allclose(out_bf16, ref, atol=1e-1, rtol=1e-1), "bf16 path diverged"

    print("KERNEL_OK")
</pallas_src>

<mosaic_0001>
module attributes {stable_mosaic.version = 11 : i64} {
  func.func @_conv_bn_lrelu_kernel(%arg0: i32, %arg1: memref<4x16xf32, #tpu.memory_space<vmem>>, %arg2: memref<8x12xf32, #tpu.memory_space<vmem>>, %arg3: memref<8x2xf32, #tpu.memory_space<vmem>>, %arg4: memref<8x12xf32, #tpu.memory_space<vmem>>) attributes {dimension_semantics = [#tpu.dimension_semantics<parallel>], iteration_bounds = array<i64: 2>, scalar_prefetch = 0 : i64, scratch_operands = 0 : i64, tpu.core_type = #tpu.core_type<tc>, window_params = [{pipeline_mode = #tpu.pipeline_mode<synchronous>, transform_indices = @transform_0, window_bounds = array<i64: 4, 16>}, {transform_indices = @transform_1, window_bounds = array<i64: 8, 12>}, {transform_indices = @transform_2, window_bounds = array<i64: 8, 2>}, {transform_indices = @transform_3, window_bounds = array<i64: 8, 12>}]} {
    %c0 = arith.constant 0 : index
    %c0_0 = arith.constant 0 : index
    %0 = vector.load %arg2[%c0, %c0_0] : memref<8x12xf32, #tpu.memory_space<vmem>>, vector<8x4xf32>
    %c0_1 = arith.constant 0 : index
    %c0_2 = arith.constant 0 : index
    %1 = vector.load %arg1[%c0_1, %c0_2] : memref<4x16xf32, #tpu.memory_space<vmem>>, vector<4x12xf32>
    %cst = arith.constant dense<0.000000e+00> : vector<8x12xf32>
    %2 = tpu.matmul %0, %1, %cst {dimension_numbers = #tpu.dot_dimension_numbers<[1], [0], [0], [1], [0, 0, 1, 1], [], []>} : vector<8x4xf32>, vector<4x12xf32>, vector<8x12xf32> -> vector<8x12xf32>
    %c0_3 = arith.constant 0 : index
    %c4 = arith.constant 4 : index
    %3 = vector.load %arg2[%c0_3, %c4] : memref<8x12xf32, #tpu.memory_space<vmem>>, vector<8x4xf32>
    %c0_4 = arith.constant 0 : index
    %c2 = arith.constant 2 : index
    %4 = vector.load %arg1[%c0_4, %c2] : memref<4x16xf32, #tpu.memory_space<vmem>>, vector<4x12xf32>
    %cst_5 = arith.constant dense<0.000000e+00> : vector<8x12xf32>
    %5 = tpu.matmul %3, %4, %cst_5 {dimension_numbers = #tpu.dot_dimension_numbers<[1], [0], [0], [1], [0, 0, 1, 1], [], []>} : vector<8x4xf32>, vector<4x12xf32>, vector<8x12xf32> -> vector<8x12xf32>
    %6 = arith.addf %2, %5 : vector<8x12xf32>
    %c0_6 = arith.constant 0 : index
    %c8 = arith.constant 8 : index
    %7 = vector.load %arg2[%c0_6, %c8] : memref<8x12xf32, #tpu.memory_space<vmem>>, vector<8x4xf32>
    %c0_7 = arith.constant 0 : index
    %c4_8 = arith.constant 4 : index
    %8 = vector.load %arg1[%c0_7, %c4_8] : memref<4x16xf32, #tpu.memory_space<vmem>>, vector<4x12xf32>
    %cst_9 = arith.constant dense<0.000000e+00> : vector<8x12xf32>
    %9 = tpu.matmul %7, %8, %cst_9 {dimension_numbers = #tpu.dot_dimension_numbers<[1], [0], [0], [1], [0, 0, 1, 1], [], []>} : vector<8x4xf32>, vector<4x12xf32>, vector<8x12xf32> -> vector<8x12xf32>
    %10 = arith.addf %6, %9 : vector<8x12xf32>
    %cst_10 = arith.constant dense<0.000000e+00> : vector<8xf32>
    %11 = vector.multi_reduction <add>, %10, %cst_10 [1] : vector<8x12xf32> to vector<8xf32>
    %12 = vector.shape_cast %11 : vector<8xf32> to vector<8x1xf32>
    %cst_11 = arith.constant 0.0833333358 : f32
    %13 = vector.broadcast %cst_11 : f32 to vector<8x1xf32>
    %14 = arith.mulf %12, %13 : vector<8x1xf32>
    %15 = arith.mulf %10, %10 : vector<8x12xf32>
    %cst_12 = arith.constant dense<0.000000e+00> : vector<8xf32>
    %16 = vector.multi_reduction <add>, %15, %cst_12 [1] : vector<8x12xf32> to vector<8xf32>
    %17 = vector.shape_cast %16 : vector<8xf32> to vector<8x1xf32>
    %cst_13 = arith.constant 0.0833333358 : f32
    %18 = vector.broadcast %cst_13 : f32 to vector<8x1xf32>
    %19 = arith.mulf %17, %18 : vector<8x1xf32>
    %20 = arith.mulf %14, %14 : vector<8x1xf32>
    %21 = arith.subf %19, %20 : vector<8x1xf32>
    %cst_14 = arith.constant 0.000000e+00 : f32
    %22 = vector.broadcast %cst_14 : f32 to vector<8x1xf32>
    %23 = arith.maximumf %21, %22 : vector<8x1xf32>
    %c0_15 = arith.constant 0 : index
    %c0_16 = arith.constant 0 : index
    %24 = vector.load %arg3[%c0_15, %c0_16] : memref<8x2xf32, #tpu.memory_space<vmem>>, vector<8x1xf32>
    %c0_17 = arith.constant 0 : index
    %c1 = arith.constant 1 : index
    %25 = vector.load %arg3[%c0_17, %c1] : memref<8x2xf32, #tpu.memory_space<vmem>>, vector<8x1xf32>
    %cst_18 = arith.constant 9.99999974E-6 : f32
    %26 = vector.broadcast %cst_18 : f32 to vector<8x1xf32>
    %27 = arith.addf %23, %26 : vector<8x1xf32>
    %28 = math.rsqrt %27 : vector<8x1xf32>
    %29 = arith.mulf %24, %28 : vector<8x1xf32>
    %30 = arith.mulf %14, %29 : vector<8x1xf32>
    %31 = arith.subf %25, %30 : vector<8x1xf32>
    %32 = vector.broadcast %29 : vector<8x1xf32> to vector<8x12xf32>
    %33 = arith.mulf %10, %32 : vector<8x12xf32>
    %34 = vector.broadcast %31 : vector<8x1xf32> to vector<8x12xf32>
    %35 = arith.addf %33, %34 : vector<8x12xf32>
    %cst_19 = arith.constant 0.181818187 : f32
    %36 = vector.broadcast %cst_19 : f32 to vector<8x12xf32>
    %37 = arith.mulf %36, %35 : vector<8x12xf32>
    %38 = arith.maximumf %35, %37 : vector<8x12xf32>
    %c0_20 = arith.constant 0 : index
    %c0_21 = arith.constant 0 : index
    %39 = vector.load %arg4[%c0_20, %c0_21] : memref<8x12xf32, #tpu.memory_space<vmem>>, vector<8x12xf32>
    tpu.vector_store %arg4[%c0_20, %c0_21], %38 {strides = array<i32>} : memref<8x12xf32, #tpu.memory_space<vmem>>, vector<8x12xf32>,
    return
  }
  func.func @transform_0(%arg0: i32) -> (i32, i32) {
    %c0_i32 = arith.constant 0 : i32
    %c0_i32_0 = arith.constant 0 : i32
    %c0_i32_1 = arith.constant 0 : i32
    return %c0_i32, %c0_i32_0 : i32, i32
  }
  func.func @transform_1(%arg0: i32) -> (i32, i32) {
    %c0_i32 = arith.constant 0 : i32
    %c0_i32_0 = arith.constant 0 : i32
    return %arg0, %c0_i32 : i32, i32
  }
  func.func @transform_2(%arg0: i32) -> (i32, i32) {
    %c0_i32 = arith.constant 0 : i32
    %c0_i32_0 = arith.constant 0 : i32
    return %arg0, %c0_i32 : i32, i32
  }
  func.func @transform_3(%arg0: i32) -> (i32, i32) {
    %c0_i32 = arith.constant 0 : i32
    %c0_i32_0 = arith.constant 0 : i32
    return %arg0, %c0_i32 : i32, i32
  }
}

module attributes {stable_mosaic.version = 11 : i64} {
  func.func @_conv_bn_lrelu_kernel(%arg0: i32, %arg1: memref<16x12xf32, #tpu.memory_space<vmem>>, %arg2: memref<8x48xf32, #tpu.memory_space<vmem>>, %arg3: memref<8x2xf32, #tpu.memory_space<vmem>>, %arg4: memref<8x8xf32, #tpu.memory_space<vmem>>) attributes {dimension_semantics = [#tpu.dimension_semantics<parallel>], iteration_bounds = array<i64: 2>, scalar_prefetch = 0 : i64, scratch_operands = 0 : i64, tpu.core_type = #tpu.core_type<tc>, window_params = [{pipeline_mode = #tpu.pipeline_mode<synchronous>, transform_indices = @transform_0, window_bounds = array<i64: 16, 12>}, {transform_indices = @transform_1, window_bounds = array<i64: 8, 48>}, {transform_indices = @transform_2, window_bounds = array<i64: 8, 2>}, {transform_indices = @transform_3, window_bounds = array<i64: 8, 8>}]} {
    %c0 = arith.constant 0 : index
    %c0_0 = arith.constant 0 : index
    %0 = vector.load %arg2[%c0, %c0_0] : memref<8x48xf32, #tpu.memory_space<vmem>>, vector<8x16xf32>
    %c0_1 = arith.constant 0 : index
    %c0_2 = arith.constant 0 : index
    %1 = vector.load %arg1[%c0_1, %c0_2] : memref<16x12xf32, #tpu.memory_space<vmem>>, vector<16x8xf32>
    %cst = arith.constant dense<0.000000e+00> : vector<8x8xf32>
    %2 = tpu.matmul %0, %1, %cst {dimension_numbers = #tpu.dot_dimension_numbers<[1], [0], [0], [1], [0, 0, 1, 1], [], []>} : vector<8x16xf32>, vector<16x8xf32>, vector<8x8xf32> -> vector<8x8xf32>
    %c0_3 = arith.constant 0 : index
    %c16 = arith.constant 16 : index
    %3 = vector.load %arg2[%c0_3, %c16] : memref<8x48xf32, #tpu.memory_space<vmem>>, vector<8x16xf32>
    %c0_4 = arith.constant 0 : index
    %c2 = arith.constant 2 : index
    %4 = vector.load %arg1[%c0_4, %c2] : memref<16x12xf32, #tpu.memory_space<vmem>>, vector<16x8xf32>
    %cst_5 = arith.constant dense<0.000000e+00> : vector<8x8xf32>
    %5 = tpu.matmul %3, %4, %cst_5 {dimension_numbers = #tpu.dot_dimension_numbers<[1], [0], [0], [1], [0, 0, 1, 1], [], []>} : vector<8x16xf32>, vector<16x8xf32>, vector<8x8xf32> -> vector<8x8xf32>
    %6 = arith.addf %2, %5 : vector<8x8xf32>
    %c0_6 = arith.constant 0 : index
    %c32 = arith.constant 32 : index
    %7 = vector.load %arg2[%c0_6, %c32] : memref<8x48xf32, #tpu.memory_space<vmem>>, vector<8x16xf32>
    %c0_7 = arith.constant 0 : index
    %c4 = arith.constant 4 : index
    %8 = vector.load %arg1[%c0_7, %c4] : memref<16x12xf32, #tpu.memory_space<vmem>>, vector<16x8xf32>
    %cst_8 = arith.constant dense<0.000000e+00> : vector<8x8xf32>
    %9 = tpu.matmul %7, %8, %cst_8 {dimension_numbers = #tpu.dot_dimension_numbers<[1], [0], [0], [1], [0, 0, 1, 1], [], []>} : vector<8x16xf32>, vector<16x8xf32>, vector<8x8xf32> -> vector<8x8xf32>
    %10 = arith.addf %6, %9 : vector<8x8xf32>
    %cst_9 = arith.constant dense<0.000000e+00> : vector<8xf32>
    %11 = vector.multi_reduction <add>, %10, %cst_9 [1] : vector<8x8xf32> to vector<8xf32>
    %12 = vector.shape_cast %11 : vector<8xf32> to vector<8x1xf32>
    %cst_10 = arith.constant 1.250000e-01 : f32
    %13 = vector.broadcast %cst_10 : f32 to vector<8x1xf32>
    %14 = arith.mulf %12, %13 : vector<8x1xf32>
    %15 = arith.mulf %10, %10 : vector<8x8xf32>
    %cst_11 = arith.constant dense<0.000000e+00> : vector<8xf32>
    %16 = vector.multi_reduction <add>, %15, %cst_11 [1] : vector<8x8xf32> to vector<8xf32>
    %17 = vector.shape_cast %16 : vector<8xf32> to vector<8x1xf32>
    %cst_12 = arith.constant 1.250000e-01 : f32
    %18 = vector.broadcast %cst_12 : f32 to vector<8x1xf32>
    %19 = arith.mulf %17, %18 : vector<8x1xf32>
    %20 = arith.mulf %14, %14 : vector<8x1xf32>
    %21 = arith.subf %19, %20 : vector<8x1xf32>
    %cst_13 = arith.constant 0.000000e+00 : f32
    %22 = vector.broadcast %cst_13 : f32 to vector<8x1xf32>
    %23 = arith.maximumf %21, %22 : vector<8x1xf32>
    %c0_14 = arith.constant 0 : index
    %c0_15 = arith.constant 0 : index
    %24 = vector.load %arg3[%c0_14, %c0_15] : memref<8x2xf32, #tpu.memory_space<vmem>>, vector<8x1xf32>
    %c0_16 = arith.constant 0 : index
    %c1 = arith.constant 1 : index
    %25 = vector.load %arg3[%c0_16, %c1] : memref<8x2xf32, #tpu.memory_space<vmem>>, vector<8x1xf32>
    %cst_17 = arith.constant 9.99999974E-6 : f32
    %26 = vector.broadcast %cst_17 : f32 to vector<8x1xf32>
    %27 = arith.addf %23, %26 : vector<8x1xf32>
    %28 = math.rsqrt %27 : vector<8x1xf32>
    %29 = arith.mulf %24, %28 : vector<8x1xf32>
    %30 = arith.mulf %14, %29 : vector<8x1xf32>
    %31 = arith.subf %25, %30 : vector<8x1xf32>
    %32 = vector.broadcast %29 : vector<8x1xf32> to vector<8x8xf32>
    %33 = arith.mulf %10, %32 : vector<8x8xf32>
    %34 = vector.broadcast %31 : vector<8x1xf32> to vector<8x8xf32>
    %35 = arith.addf %33, %34 : vector<8x8xf32>
    %cst_18 = arith.constant 0.181818187 : f32
    %36 = vector.broadcast %cst_18 : f32 to vector<8x8xf32>
    %37 = arith.mulf %36, %35 : vector<8x8xf32>
    %38 = arith.maximumf %35, %37 : vector<8x8xf32>
    %c0_19 = arith.constant 0 : index
    %c0_20 = arith.constant 0 : index
    %39 = vector.load %arg4[%c0_19, %c0_20] : memref<8x8xf32, #tpu.memory_space<vmem>>, vector<8x8xf32>
    tpu.vector_store %arg4[%c0_19, %c0_20], %38 {strides = array<i32>} : memref<8x8xf32, #tpu.memory_space<vmem>>, vector<8x8xf32>,
    return
  }
  func.func @transform_0(%arg0: i32) -> (i32, i32) {
    %c0_i32 = arith.constant 0 : i32
    %c0_i32_0 = arith.constant 0 : i32
    %c0_i32_1 = arith.constant 0 : i32
    return %c0_i32, %c0_i32_0 : i32, i32
  }
  func.func @transform_1(%arg0: i32) -> (i32, i32) {
    %c0_i32 = arith.constant 0 : i32
    %c0_i32_0 = arith.constant 0 : i32
    return %arg0, %c0_i32 : i32, i32
  }
  func.func @transform_2(%arg0: i32) -> (i32, i32) {
    %c0_i32 = arith.constant 0 : i32
    %c0_i32_0 = arith.constant 0 : i32
    return %arg0, %c0_i32 : i32, i32
  }
  func.func @transform_3(%arg0: i32) -> (i32, i32) {
    %c0_i32 = arith.constant 0 : i32
    %c0_i32_0 = arith.constant 0 : i32
    return %arg0, %c0_i32 : i32, i32
  }
}

</mosaic_0001>

<llo_original>
// kernel: down_scale.3
$region0: #{down_scale.3}
  #allocation0 [shape = 'u32[]', space=smem, size = 0x4, offset = 0x4, fixed_abs, tag = 'smem constant byte address 0x4 - core index']
  #allocation1 [shape = 'u32[144,128]{1,0:T(1,128)}', space=vmem, size = 0x12000, scoped, tag = 'internal scratch']
  %s0 = inlined_call_operand.vmem [shape: f32[16,12], index: 0, kind: input, shape index: {}]
  %s1 = inlined_call_operand.vmem [shape: f32[16,48], index: 1, kind: input, shape index: {}]
  %s2 = inlined_call_operand.vmem [shape: f32[16,2], index: 2, kind: input, shape index: {}]
  %s3 = inlined_call_operand.vmem [shape: f32[16,8], index: 3, kind: output, shape index: {}]
  %s4 = sld [smem:[#allocation0]]
  $region45: #{down_scale.3} parent=0
    _
  %s6 = ssub.s32 1, %s4
  %s7 = scalar_select 0, %s6, %s4
  loop: start=0, step=1, limit=4
  $region2: #{down_scale.3} parent=0 // loop_pre_header
    _
  $region3: #{down_scale.3} parent=0 // loop_header
    %s9 = sphi 0, %s13
    %p10 = scmp.ge.s32.totalorder %s9, 4
    %s17 = sphi 0, %s17
    %s19 = sphi 0, %s17
    %s20 = sphi 0, %s19
    %s34 = sphi 0, %s20
    %s40 = sphi 0, %s42
    %s43 = sphi 0, %s40
    %s44 = sphi 0, %s43
    %s60 = sphi 0, %s44
    %s66 = sphi 0, %s68
    %s69 = sphi 0, %s66
    %s70 = sphi 0, %s69
    %s86 = sphi 0, %s70
    %s92 = sphi 0, %s94
    %s95 = sphi 0, %s92
    %s96 = sphi 0, %s95
    %s112 = sphi 0, %s96
  $region4: #{down_scale.3} parent=0 // loop_header_branch
    %12 = sbr.rel (%p10) target = $region8
  $region5: #{down_scale.3} parent=0 // loop_body
    %s14 = ssub.s32 %s9, 1
    %s15 = ssub.s32 %s9, 2
    %s16 = sadd.s32 %s9, 1
    %s18 = sadd.s32 %s17, 1
    %p21 = scmp.eq.s32.totalorder %s9, 1
    %p22 = scmp.ne.s32.totalorder %s17, %s19
    %p23 = scmp.eq.s32.totalorder %s9, 0
    %p24 = por %p22, %p23
    %p25 = scmp.ne.s32.totalorder %s17, %s19
    %p26 = scmp.eq.s32.totalorder %s14, 1
    %p27 = por %p25, %p26
    %p28 = scmp.ne.s32.totalorder %s19, %s20
    %p29 = scmp.eq.s32.totalorder %s14, 0
    %p30 = por %p28, %p29
    %p31 = scmp.ne.s32.totalorder %s19, %s20
    %p32 = scmp.eq.s32.totalorder %s15, 1
    %p33 = por %p31, %p32
    %p35 = scmp.ne.s32.totalorder %s20, %s34
    %p36 = scmp.eq.s32.totalorder %s15, 0
    %p37 = por %p35, %p36
    %s38 = ssub.s32 %s9, %s16
    %p39 = scmp.eq.s32.totalorder %s38, 0
    %s41 = sadd.s32 %s40, 1
    %s42 = scalar_select %p39, %s40, %s41
    %p45 = pneg %p39
    %p46 = scmp.eq.s32.totalorder %s9, 1
    %p47 = por %p45, %p46
    %p48 = scmp.ne.s32.totalorder %s40, %s43
    %p49 = scmp.eq.s32.totalorder %s9, 0
    %p50 = por %p48, %p49
    %p51 = scmp.ne.s32.totalorder %s40, %s43
    %p52 = scmp.eq.s32.totalorder %s14, 1
    %p53 = por %p51, %p52
    %p54 = scmp.ne.s32.totalorder %s43, %s44
    %p55 = scmp.eq.s32.totalorder %s14, 0
    %p56 = por %p54, %p55
    %p57 = scmp.ne.s32.totalorder %s43, %s44
    %p58 = scmp.eq.s32.totalorder %s15, 1
    %p59 = por %p57, %p58
    %p61 = scmp.ne.s32.totalorder %s44, %s60
    %p62 = scmp.eq.s32.totalorder %s15, 0
    %p63 = por %p61, %p62
    %s64 = ssub.s32 %s9, %s16
    %p65 = scmp.eq.s32.totalorder %s64, 0
    %s67 = sadd.s32 %s66, 1
    %s68 = scalar_select %p65, %s66, %s67
    %p71 = pneg %p65
    %p72 = scmp.eq.s32.totalorder %s9, 1
    %p73 = por %p71, %p72
    %p74 = scmp.ne.s32.totalorder %s66, %s69
    %p75 = scmp.eq.s32.totalorder %s9, 0
    %p76 = por %p74, %p75
    %p77 = scmp.ne.s32.totalorder %s66, %s69
    %p78 = scmp.eq.s32.totalorder %s14, 1
    %p79 = por %p77, %p78
    %p80 = scmp.ne.s32.totalorder %s69, %s70
    %p81 = scmp.eq.s32.totalorder %s14, 0
    %p82 = por %p80, %p81
    %p83 = scmp.ne.s32.totalorder %s69, %s70
    %p84 = scmp.eq.s32.totalorder %s15, 1
    %p85 = por %p83, %p84
    %p87 = scmp.ne.s32.totalorder %s70, %s86
    %p88 = scmp.eq.s32.totalorder %s15, 0
    %p89 = por %p87, %p88
    %s90 = ssub.s32 %s9, %s16
    %p91 = scmp.eq.s32.totalorder %s90, 0
    %s93 = sadd.s32 %s92, 1
    %s94 = scalar_select %p91, %s92, %s93
    %p97 = pneg %p91
    %p98 = scmp.eq.s32.totalorder %s9, 1
    %p99 = por %p97, %p98
    %p100 = scmp.ne.s32.totalorder %s92, %s95
    %p101 = scmp.eq.s32.totalorder %s9, 0
    %p102 = por %p100, %p101
    %p103 = scmp.ne.s32.totalorder %s92, %s95
    %p104 = scmp.eq.s32.totalorder %s14, 1
    %p105 = por %p103, %p104
    %p106 = scmp.ne.s32.totalorder %s95, %s96
    %p107 = scmp.eq.s32.totalorder %s14, 0
    %p108 = por %p106, %p107
    %p109 = scmp.ne.s32.totalorder %s95, %s96
    %p110 = scmp.eq.s32.totalorder %s15, 1
    %p111 = por %p109, %p110
    %p113 = scmp.ne.s32.totalorder %s96, %s112
    %p114 = scmp.eq.s32.totalorder %s15, 0
    %p115 = por %p113, %p114
    %p116 = scmp.le.s32.totalorder 1, %s9
    %p117 = scmp.lt.s32.totalorder %s9, 3
    %p118 = pnand %p116, %p117
    %p119 = pneg %p118
    // Predicated region
    $region9: #{down_scale.3} parent=5 // pred_check
      _
    $region10: #{down_scale.3} parent=5 // pred_check_branch
      %121 = sbr.rel (%p118) target = $region12
    $region11: #{down_scale.3} parent=5 // pred_region
      %s122 = ssub.s32 %s9, 1
      // Predicated region
      $region13: #{down_scale.3} parent=11 // pred_check
        %p123 = pneg %p30
      $region14: #{down_scale.3} parent=11 // pred_check_branch
        %125 = sbr.rel (%p123) target = $region16
      $region15: #{down_scale.3} parent=11 // pred_region
        _
      $region16: #{down_scale.3} parent=11 // pred_fallthru
        _
    $region12: #{down_scale.3} parent=5 // pred_fallthru
      _
    %p126 = scmp.lt.s32.totalorder %s9, 2
    // Predicated region
    $region17: #{down_scale.3} parent=5 // pred_check
      %p127 = pneg %p126
    $region18: #{down_scale.3} parent=5 // pred_check_branch
      %129 = sbr.rel (%p127) target = $region20
    $region19: #{down_scale.3} parent=5 // pred_region
      // Predicated region
      $region21: #{down_scale.3} parent=19 // pred_check
        %p130 = pneg %p50
      $region22: #{down_scale.3} parent=19 // pred_check_branch
        %132 = sbr.rel (%p130) target = $region24
      $region23: #{down_scale.3} parent=19 // pred_region
        %p133 = scmp.lt.s32.totalorder %s9, 1
        %s134 = scalar_select %p133, %s9, 1
        %s135 = smul.addr %s134, 8
        %s136 = scalar_lea.vmem %s1, %s135
      $region24: #{down_scale.3} parent=19 // pred_fallthru
        _
      // Predicated region
      $region25: #{down_scale.3} parent=19 // pred_check
        %p137 = pneg %p76
      $region26: #{down_scale.3} parent=19 // pred_check_branch
        %139 = sbr.rel (%p137) target = $region28
      $region27: #{down_scale.3} parent=19 // pred_region
        %p140 = scmp.lt.s32.totalorder %s9, 1
        %s141 = scalar_select %p140, %s9, 1
        %s142 = smul.addr %s141, 8
        %s143 = scalar_lea.vmem %s2, %s142
      $region28: #{down_scale.3} parent=19 // pred_fallthru
        _
    $region20: #{down_scale.3} parent=5 // pred_fallthru
      _
    %p144 = scmp.le.s32.totalorder 1, %s9
    %p145 = scmp.lt.s32.totalorder %s9, 3
    %p146 = pnand %p144, %p145
    %p147 = pneg %p146
    // Predicated region
    $region29: #{down_scale.3} parent=5 // pred_check
      _
    $region30: #{down_scale.3} parent=5 // pred_check_branch
      %149 = sbr.rel (%p146) target = $region32
    $region31: #{down_scale.3} parent=5 // pred_region
      %s150 = ssub.s32 %s9, 1
      %p151 = pneg %p30
      %p152 = pneg %p27
      %p153 = scmp.lt.s32.totalorder %s14, 1
      %s154 = scalar_select %p153, %s14, 1
      %s155 = smul.addr %s154, 8
      %s156 = scalar_lea.vmem %s1, %s155
      %p157 = pneg %p56
      %p158 = pneg %p53
      %p159 = scmp.lt.s32.totalorder %s14, 1
      %s160 = scalar_select %p159, %s14, 1
      %s161 = smul.addr %s160, 8
      %s162 = scalar_lea.vmem %s2, %s161
      %p163 = pneg %p82
      %p164 = pneg %p79
      %p165 = pneg %p108
      %p166 = pneg %p105
      %p167 = scmp.lt.s32.totalorder %s14, 1
      %s168 = scalar_select %p167, %s14, 1
      %s169 = smul.addr %s168, 8
      %s170 = scalar_lea.vmem %s3, %s169
      %p171 = scmp.lt.s32.totalorder %s14, 1
      %s172 = scalar_select %p171, %s14, 1
      %s173 = smul.addr %s172, 8
      %s174 = scalar_lea.vmem %s1, %s173
      %p175 = scmp.lt.s32.totalorder %s14, 1
      %s176 = scalar_select %p175, %s14, 1
      %s177 = smul.addr %s176, 8
      %s178 = scalar_lea.vmem %s2, %s177
      %p179 = scmp.lt.s32.totalorder %s14, 1
      %s180 = scalar_select %p179, %s14, 1
      %s181 = smul.addr %s180, 8
      %s182 = scalar_lea.vmem %s3, %s181
      %v183 = vld [vmem:[%s174] sm:$0xff]
      %v184 = vld [vmem:[%s0] sm:$0xff]
      %v185 = vld [vmem:[%s0 + $0x8] sm:$0xff]
      %187 = vrot.lane.b32.xlu0 %v183, 112
      %v188 = vpop.permute.xlu0 %187
      %191 = vrot.lane.b32.xlu0 %v184, 126
      %v192 = vpop.permute.xlu0 %191
      %193 = vrot.lane.b32.xlu0 %v185, 126
      %v194 = vpop.permute.xlu0 %193
      %vm197 = vcmask 130048
      %v198 = vsel %vm197, %v188, 0
      %200 = vmatprep.subr.mxu0 0.0
      %201 = vmatpush1.msra.mxu0 %v192
      %202 = vmatprep.subr.mxu0 0.0
      %203 = vmatpush1.msra.mxu0 %v194
      %204 = vmatprep.subr.mxu0 0.0
      %205 = vmatpush1.msra.mxu0 0.0
      %206 = vmatprep.subr.mxu0 0.0
      %207 = vmatpush1.msra.mxu0 0.0
      %208 = vmatprep.subr.mxu0 0.0
      %209 = vmatpush1.msra.mxu0 0.0
      %210 = vmatprep.subr.mxu0 0.0
      %211 = vmatpush1.msra.mxu0 0.0
      %212 = vmatprep.subr.mxu0 0.0
      %213 = vmatpush1.msra.mxu0 0.0
      %214 = vmatprep.subr.mxu0 0.0
      %215 = vmatpush1.msra.mxu0 0.0
      %216 = vmatprep.subr.mxu0 0.0
      %217 = vmatpush1.msra.mxu0 0.0
      %218 = vmatprep.subr.mxu0 0.0
      %219 = vmatpush1.msra.mxu0 0.0
      %220 = vmatprep.subr.mxu0 0.0
      %221 = vmatpush1.msra.mxu0 0.0
      %222 = vmatprep.subr.mxu0 0.0
      %223 = vmatpush1.msra.mxu0 0.0
      %224 = vmatprep.subr.mxu0 0.0
      %225 = vmatpush1.msra.mxu0 0.0
      %226 = vmatprep.subr.mxu0 0.0
      %227 = vmatpush1.msra.mxu0 0.0
      %228 = vmatprep.subr.mxu0 0.0
      %229 = vmatpush1.msra.mxu0 0.0
      %230 = vmatprep.subr.mxu0 0.0
      %231 = vmatpush1.msra.mxu0 0.0
      %232 = vmatprep.subr.mxu0 0.0
      %233 = vmatpush1.msra.mxu0 0.0
      %234 = vmatprep.subr.mxu0 0.0
      %235 = vmatpush1.msra.mxu0 0.0
      %236 = vmatprep.subr.mxu0 0.0
      %237 = vmatpush1.msra.mxu0 0.0
      %238 = vmatprep.subr.mxu0 0.0
      %239 = vmatpush1.msra.mxu0 0.0
      %240 = vmatprep.subr.mxu0 0.0
      %241 = vmatpush1.msra.mxu0 0.0
      %242 = vmatprep.subr.mxu0 0.0
      %243 = vmatpush1.msra.mxu0 0.0
      %244 = vmatprep.subr.mxu0 0.0
      %245 = vmatpush1.msra.mxu0 0.0
      %246 = vmatprep.subr.mxu0 0.0
      %247 = vmatpush1.msra.mxu0 0.0
      %248 = vmatprep.subr.mxu0 0.0
      %249 = vmatpush1.msra.mxu0 0.0
      %250 = vmatprep.subr.mxu0 0.0
      %251 = vmatpush1.msra.mxu0 0.0
      %252 = vmatprep.subr.mxu0 0.0
      %253 = vmatpush1.msra.mxu0 0.0
      %254 = vmatprep.subr.mxu0 0.0
      %255 = vmatpush1.msra.mxu0 0.0
      %256 = vmatprep.subr.mxu0 0.0
      %257 = vmatpush1.msra.mxu0 0.0
      %258 = vmatprep.subr.mxu0 0.0
      %259 = vmatpush1.msra.mxu0 0.0
      %260 = vmatprep.subr.mxu0 0.0
      %261 = vmatpush1.msra.mxu0 0.0
      %262 = vmatprep.subr.mxu0 0.0
      %263 = vmatpush1.msra.mxu0 0.0
      %264 = vmatprep.mubr.f32.mxu0 0.0
      %265 = vmatmul.mubr.f32.gmra.mrb[0].mxu0 %v198
      %v266 = vpop.f32.mrb[0].mxu0
      %v267 = vadd.f32 0.0, %v266
      %v268 = vpop.f32.mrb[0].mxu0
      %269 = vdwg.mxu0
      %v270 = vsel %vm197, %v183, 0
      %272 = vmatprep.subr.mxu0 0.0
      %273 = vmatpush1.msra.mxu0 %v184
      %274 = vmatprep.subr.mxu0 0.0
      %275 = vmatpush1.msra.mxu0 %v185
      %276 = vmatprep.subr.mxu0 0.0
      %277 = vmatpush1.msra.mxu0 0.0
      %278 = vmatprep.subr.mxu0 0.0
      %279 = vmatpush1.msra.mxu0 0.0
      %280 = vmatprep.subr.mxu0 0.0
      %281 = vmatpush1.msra.mxu0 0.0
      %282 = vmatprep.subr.mxu0 0.0
      %283 = vmatpush1.msra.mxu0 0.0
      %284 = vmatprep.subr.mxu0 0.0
      %285 = vmatpush1.msra.mxu0 0.0
      %286 = vmatprep.subr.mxu0 0.0
      %287 = vmatpush1.msra.mxu0 0.0
      %288 = vmatprep.subr.mxu0 0.0
      %289 = vmatpush1.msra.mxu0 0.0
      %290 = vmatprep.subr.mxu0 0.0
      %291 = vmatpush1.msra.mxu0 0.0
      %292 = vmatprep.subr.mxu0 0.0
      %293 = vmatpush1.msra.mxu0 0.0
      %294 = vmatprep.subr.mxu0 0.0
      %295 = vmatpush1.msra.mxu0 0.0
      %296 = vmatprep.subr.mxu0 0.0
      %297 = vmatpush1.msra.mxu0 0.0
      %298 = vmatprep.subr.mxu0 0.0
      %299 = vmatpush1.msra.mxu0 0.0
      %300 = vmatprep.subr.mxu0 0.0
      %301 = vmatpush1.msra.mxu0 0.0
      %302 = vmatprep.subr.mxu0 0.0
      %303 = vmatpush1.msra.mxu0 0.0
      %304 = vmatprep.subr.mxu0 0.0
      %305 = vmatpush1.msra.mxu0 0.0
      %306 = vmatprep.subr.mxu0 0.0
      %307 = vmatpush1.msra.mxu0 0.0
      %308 = vmatprep.subr.mxu0 0.0
      %309 = vmatpush1.msra.mxu0 0.0
      %310 = vmatprep.subr.mxu0 0.0
      %311 = vmatpush1.msra.mxu0 0.0
      %312 = vmatprep.subr.mxu0 0.0
      %313 = vmatpush1.msra.mxu0 0.0
      %314 = vmatprep.subr.mxu0 0.0
      %315 = vmatpush1.msra.mxu0 0.0
      %316 = vmatprep.subr.mxu0 0.0
      %317 = vmatpush1.msra.mxu0 0.0
      %318 = vmatprep.subr.mxu0 0.0
      %319 = vmatpush1.msra.mxu0 0.0
      %320 = vmatprep.subr.mxu0 0.0
      %321 = vmatpush1.msra.mxu0 0.0
      %322 = vmatprep.subr.mxu0 0.0
      %323 = vmatpush1.msra.mxu0 0.0
      %324 = vmatprep.subr.mxu0 0.0
      %325 = vmatpush1.msra.mxu0 0.0
      %326 = vmatprep.subr.mxu0 0.0
      %327 = vmatpush1.msra.mxu0 0.0
      %328 = vmatprep.subr.mxu0 0.0
      %329 = vmatpush1.msra.mxu0 0.0
      %330 = vmatprep.subr.mxu0 0.0
      %331 = vmatpush1.msra.mxu0 0.0
      %332 = vmatprep.subr.mxu0 0.0
      %333 = vmatpush1.msra.mxu0 0.0
      %334 = vmatprep.subr.mxu0 0.0
      %335 = vmatpush1.msra.mxu0 0.0
      %336 = vmatprep.mubr.f32.mxu0 0.0
      %337 = vmatmul.mubr.f32.gmra.mrb[0].mxu0 %v270
      %v338 = vpop.f32.mrb[0].mxu0
      %v339 = vadd.f32 %v267, %v338
      %v340 = vpop.f32.mrb[0].mxu0
      %341 = vdwg.mxu0
      %342 = vrot.lane.b32.xlu0 %v183, 96
      %v343 = vpop.permute.xlu0 %342
      %344 = vrot.lane.b32.xlu0 %v184, 124
      %v345 = vpop.permute.xlu0 %344
      %346 = vrot.lane.b32.xlu0 %v185, 124
      %v347 = vpop.permute.xlu0 %346
      %v350 = vsel %vm197, %v343, 0
      %352 = vmatprep.subr.mxu0 0.0
      %353 = vmatpush1.msra.mxu0 %v345
      %354 = vmatprep.subr.mxu0 0.0
      %355 = vmatpush1.msra.mxu0 %v347
      %356 = vmatprep.subr.mxu0 0.0
      %357 = vmatpush1.msra.mxu0 0.0
      %358 = vmatprep.subr.mxu0 0.0
      %359 = vmatpush1.msra.mxu0 0.0
      %360 = vmatprep.subr.mxu0 0.0
      %361 = vmatpush1.msra.mxu0 0.0
      %362 = vmatprep.subr.mxu0 0.0
      %363 = vmatpush1.msra.mxu0 0.0
      %364 = vmatprep.subr.mxu0 0.0
      %365 = vmatpush1.msra.mxu0 0.0
      %366 = vmatprep.subr.mxu0 0.0
      %367 = vmatpush1.msra.mxu0 0.0
      %368 = vmatprep.subr.mxu0 0.0
      %369 = vmatpush1.msra.mxu0 0.0
      %370 = vmatprep.subr.mxu0 0.0
      %371 = vmatpush1.msra.mxu0 0.0
      %372 = vmatprep.subr.mxu0 0.0
      %373 = vmatpush1.msra.mxu0 0.0
      %374 = vmatprep.subr.mxu0 0.0
      %375 = vmatpush1.msra.mxu0 0.0
      %376 = vmatprep.subr.mxu0 0.0
      %377 = vmatpush1.msra.mxu0 0.0
      %378 = vmatprep.subr.mxu0 0.0
      %379 = vmatpush1.msra.mxu0 0.0
      %380 = vmatprep.subr.mxu0 0.0
      %381 = vmatpush1.msra.mxu0 0.0
      %382 = vmatprep.subr.mxu0 0.0
      %383 = vmatpush1.msra.mxu0 0.0
      %384 = vmatprep.subr.mxu0 0.0
      %385 = vmatpush1.msra.mxu0 0.0
      %386 = vmatprep.subr.mxu0 0.0
      %387 = vmatpush1.msra.mxu0 0.0
      %388 = vmatprep.subr.mxu0 0.0
      %389 = vmatpush1.msra.mxu0 0.0
      %390 = vmatprep.subr.mxu0 0.0
      %391 = vmatpush1.msra.mxu0 0.0
      %392 = vmatprep.subr.mxu0 0.0
      %393 = vmatpush1.msra.mxu0 0.0
      %394 = vmatprep.subr.mxu0 0.0
      %395 = vmatpush1.msra.mxu0 0.0
      %396 = vmatprep.subr.mxu0 0.0
      %397 = vmatpush1.msra.mxu0 0.0
      %398 = vmatprep.subr.mxu0 0.0
      %399 = vmatpush1.msra.mxu0 0.0
      %400 = vmatprep.subr.mxu0 0.0
      %401 = vmatpush1.msra.mxu0 0.0
      %402 = vmatprep.subr.mxu0 0.0
      %403 = vmatpush1.msra.mxu0 0.0
      %404 = vmatprep.subr.mxu0 0.0
      %405 = vmatpush1.msra.mxu0 0.0
      %406 = vmatprep.subr.mxu0 0.0
      %407 = vmatpush1.msra.mxu0 0.0
      %408 = vmatprep.subr.mxu0 0.0
      %409 = vmatpush1.msra.mxu0 0.0
      %410 = vmatprep.subr.mxu0 0.0
      %411 = vmatpush1.msra.mxu0 0.0
      %412 = vmatprep.subr.mxu0 0.0
      %413 = vmatpush1.msra.mxu0 0.0
      %414 = vmatprep.subr.mxu0 0.0
      %415 = vmatpush1.msra.mxu0 0.0
      %416 = vmatprep.mubr.f32.mxu0 0.0
      %417 = vmatmul.mubr.f32.gmra.mrb[0].mxu0 %v350
      %v418 = vpop.f32.mrb[0].mxu0
      %v419 = vadd.f32 0.0, %v418
      %v420 = vpop.f32.mrb[0].mxu0
      %421 = vdwg.mxu0
      %v422 = vadd.f32 %v339, %v419
      %vm423 = vcmask 64512
      %v424 = vsel %vm423, %v422, 0.0
      %425 = vadd.xlane.f32.xlu0 %v424
      %v426 = vpop.xlane.xlu0 %425
      %v427 = vmul.f32 %v426, 0.125
      %v428 = vmul.f32 %v422, %v422
      %v429 = vsel %vm423, %v428, 0.0
      %430 = vadd.xlane.f32.xlu0 %v429
      %v431 = vpop.xlane.xlu0 %430
      %v432 = vmul.f32 %v431, 0.125
      %v433 = vmul.f32 %v427, %v427
      %v434 = vsub.f32 %v432, %v433
      %v435 = vmax.f32 %v434, 0.0
      %v436 = vld [vmem:[%s178] sm:$0xff]
      %v437 = vadd.f32 %v435, 1e-05
      %v438 = vrsqrt.pop %v437
      %v439 = vmul.f32 %v436, %v438
      %v440 = vmul.f32 %v427, %v439
      %442 = vrot.lane.b32.xlu0 %v440, 1
      %v443 = vpop.permute.xlu0 %442
      %v445 = vsub.f32 %v436, %v443
      %447 = vset.pattern.permute.xlu0 0
      %448 = vperm.xlu0 %447, %v439
      %v449 = vpop.permute.xlu0 %448
      %v451 = vmul.f32 %v422, %v449
      %453 = vset.pattern.permute.xlu0 1
      %454 = vperm.xlu0 %453, %v445
      %v455 = vpop.permute.xlu0 %454
      %v457 = vadd.f32 %v451, %v455
      %v458 = vmul.f32 %v457, 0.18181819
      %v459 = vmax.f32 %v457, %v458
      %460 = vst.msk [vmem:[%s182] sm:$0xff] %vm423, %v459
      %p461 = scmp.lt.s32.totalorder %s14, 1
      %s462 = scalar_select %p461, %s14, 1
      %s463 = smul.addr %s462, 8
      %s464 = scalar_lea.vmem %s3, %s463
      // Predicated region
      $region33: #{down_scale.3} parent=31 // pred_check
        %p465 = pneg %p105
      $region34: #{down_scale.3} parent=31 // pred_check_branch
        %467 = sbr.rel (%p465) target = $region36
      $region35: #{down_scale.3} parent=31 // pred_region
        _
      $region36: #{down_scale.3} parent=31 // pred_fallthru
        _
    $region32: #{down_scale.3} parent=5 // pred_fallthru
      _
    %p468 = scmp.le.s32.totalorder 2, %s9
    // Predicated region
    $region37: #{down_scale.3} parent=5 // pred_check
      %p469 = pneg %p468
    $region38: #{down_scale.3} parent=5 // pred_check_branch
      %471 = sbr.rel (%p469) target = $region40
    $region39: #{down_scale.3} parent=5 // pred_region
      %s472 = ssub.s32 %s9, 2
      // Predicated region
      $region41: #{down_scale.3} parent=39 // pred_check
        %p473 = pneg %p111
      $region42: #{down_scale.3} parent=39 // pred_check_branch
        %475 = sbr.rel (%p473) target = $region44
      $region43: #{down_scale.3} parent=39 // pred_region
        %p476 = scmp.lt.s32.totalorder %s15, 1
        %s477 = scalar_select %p476, %s15, 1
        %s478 = smul.addr %s477, 8
        %s479 = scalar_lea.vmem %s3, %s478
      $region44: #{down_scale.3} parent=39 // pred_fallthru
        _
    $region40: #{down_scale.3} parent=5 // pred_fallthru
      _
  $region6: #{down_scale.3} parent=0 // loop_footer
    %s13 = sadd.s32 1, %s9
  $region7: #{down_scale.3} parent=0 // loop_footer_branch
    %8 = sbr.rel target = $region3
  $region8: #{down_scale.3} parent=0 // loop_exit
    _

// kernel: down_scale.2
$region0: #{down_scale.2}
  #allocation0 [shape = 'u32[]', space=smem, size = 0x4, offset = 0x4, fixed_abs, tag = 'smem constant byte address 0x4 - core index']
  #allocation1 [shape = 'u32[144,128]{1,0:T(1,128)}', space=vmem, size = 0x12000, scoped, tag = 'internal scratch']
  %s0 = inlined_call_operand.vmem [shape: f32[4,16], index: 0, kind: input, shape index: {}]
  %s1 = inlined_call_operand.vmem [shape: f32[16,12], index: 1, kind: input, shape index: {}]
  %s2 = inlined_call_operand.vmem [shape: f32[16,2], index: 2, kind: input, shape index: {}]
  %s3 = inlined_call_operand.vmem [shape: f32[16,12], index: 3, kind: output, shape index: {}]
  %s4 = sld [smem:[#allocation0]]
  $region45: #{down_scale.2} parent=0
    _
  %s6 = ssub.s32 1, %s4
  %s7 = scalar_select 0, %s6, %s4
  loop: start=0, step=1, limit=4
  $region2: #{down_scale.2} parent=0 // loop_pre_header
    _
  $region3: #{down_scale.2} parent=0 // loop_header
    %s9 = sphi 0, %s13
    %p10 = scmp.ge.s32.totalorder %s9, 4
    %s17 = sphi 0, %s17
    %s19 = sphi 0, %s17
    %s20 = sphi 0, %s19
    %s34 = sphi 0, %s20
    %s40 = sphi 0, %s42
    %s43 = sphi 0, %s40
    %s44 = sphi 0, %s43
    %s60 = sphi 0, %s44
    %s66 = sphi 0, %s68
    %s69 = sphi 0, %s66
    %s70 = sphi 0, %s69
    %s86 = sphi 0, %s70
    %s92 = sphi 0, %s94
    %s95 = sphi 0, %s92
    %s96 = sphi 0, %s95
    %s112 = sphi 0, %s96
  $region4: #{down_scale.2} parent=0 // loop_header_branch
    %12 = sbr.rel (%p10) target = $region8
  $region5: #{down_scale.2} parent=0 // loop_body
    %s14 = ssub.s32 %s9, 1
    %s15 = ssub.s32 %s9, 2
    %s16 = sadd.s32 %s9, 1
    %s18 = sadd.s32 %s17, 1
    %p21 = scmp.eq.s32.totalorder %s9, 1
    %p22 = scmp.ne.s32.totalorder %s17, %s19
    %p23 = scmp.eq.s32.totalorder %s9, 0
    %p24 = por %p22, %p23
    %p25 = scmp.ne.s32.totalorder %s17, %s19
    %p26 = scmp.eq.s32.totalorder %s14, 1
    %p27 = por %p25, %p26
    %p28 = scmp.ne.s32.totalorder %s19, %s20
    %p29 = scmp.eq.s32.totalorder %s14, 0
    %p30 = por %p28, %p29
    %p31 = scmp.ne.s32.totalorder %s19, %s20
    %p32 = scmp.eq.s32.totalorder %s15, 1
    %p33 = por %p31, %p32
    %p35 = scmp.ne.s32.totalorder %s20, %s34
    %p36 = scmp.eq.s32.totalorder %s15, 0
    %p37 = por %p35, %p36
    %s38 = ssub.s32 %s9, %s16
    %p39 = scmp.eq.s32.totalorder %s38, 0
    %s41 = sadd.s32 %s40, 1
    %s42 = scalar_select %p39, %s40, %s41
    %p45 = pneg %p39
    %p46 = scmp.eq.s32.totalorder %s9, 1
    %p47 = por %p45, %p46
    %p48 = scmp.ne.s32.totalorder %s40, %s43
    %p49 = scmp.eq.s32.totalorder %s9, 0
    %p50 = por %p48, %p49
    %p51 = scmp.ne.s32.totalorder %s40, %s43
    %p52 = scmp.eq.s32.totalorder %s14, 1
    %p53 = por %p51, %p52
    %p54 = scmp.ne.s32.totalorder %s43, %s44
    %p55 = scmp.eq.s32.totalorder %s14, 0
    %p56 = por %p54, %p55
    %p57 = scmp.ne.s32.totalorder %s43, %s44
    %p58 = scmp.eq.s32.totalorder %s15, 1
    %p59 = por %p57, %p58
    %p61 = scmp.ne.s32.totalorder %s44, %s60
    %p62 = scmp.eq.s32.totalorder %s15, 0
    %p63 = por %p61, %p62
    %s64 = ssub.s32 %s9, %s16
    %p65 = scmp.eq.s32.totalorder %s64, 0
    %s67 = sadd.s32 %s66, 1
    %s68 = scalar_select %p65, %s66, %s67
    %p71 = pneg %p65
    %p72 = scmp.eq.s32.totalorder %s9, 1
    %p73 = por %p71, %p72
    %p74 = scmp.ne.s32.totalorder %s66, %s69
    %p75 = scmp.eq.s32.totalorder %s9, 0
    %p76 = por %p74, %p75
    %p77 = scmp.ne.s32.totalorder %s66, %s69
    %p78 = scmp.eq.s32.totalorder %s14, 1
    %p79 = por %p77, %p78
    %p80 = scmp.ne.s32.totalorder %s69, %s70
    %p81 = scmp.eq.s32.totalorder %s14, 0
    %p82 = por %p80, %p81
    %p83 = scmp.ne.s32.totalorder %s69, %s70
    %p84 = scmp.eq.s32.totalorder %s15, 1
    %p85 = por %p83, %p84
    %p87 = scmp.ne.s32.totalorder %s70, %s86
    %p88 = scmp.eq.s32.totalorder %s15, 0
    %p89 = por %p87, %p88
    %s90 = ssub.s32 %s9, %s16
    %p91 = scmp.eq.s32.totalorder %s90, 0
    %s93 = sadd.s32 %s92, 1
    %s94 = scalar_select %p91, %s92, %s93
    %p97 = pneg %p91
    %p98 = scmp.eq.s32.totalorder %s9, 1
    %p99 = por %p97, %p98
    %p100 = scmp.ne.s32.totalorder %s92, %s95
    %p101 = scmp.eq.s32.totalorder %s9, 0
    %p102 = por %p100, %p101
    %p103 = scmp.ne.s32.totalorder %s92, %s95
    %p104 = scmp.eq.s32.totalorder %s14, 1
    %p105 = por %p103, %p104
    %p106 = scmp.ne.s32.totalorder %s95, %s96
    %p107 = scmp.eq.s32.totalorder %s14, 0
    %p108 = por %p106, %p107
    %p109 = scmp.ne.s32.totalorder %s95, %s96
    %p110 = scmp.eq.s32.totalorder %s15, 1
    %p111 = por %p109, %p110
    %p113 = scmp.ne.s32.totalorder %s96, %s112
    %p114 = scmp.eq.s32.totalorder %s15, 0
    %p115 = por %p113, %p114
    %p116 = scmp.le.s32.totalorder 1, %s9
    %p117 = scmp.lt.s32.totalorder %s9, 3
    %p118 = pnand %p116, %p117
    %p119 = pneg %p118
    // Predicated region
    $region9: #{down_scale.2} parent=5 // pred_check
      _
    $region10: #{down_scale.2} parent=5 // pred_check_branch
      %121 = sbr.rel (%p118) target = $region12
    $region11: #{down_scale.2} parent=5 // pred_region
      %s122 = ssub.s32 %s9, 1
      // Predicated region
      $region13: #{down_scale.2} parent=11 // pred_check
        %p123 = pneg %p30
      $region14: #{down_scale.2} parent=11 // pred_check_branch
        %125 = sbr.rel (%p123) target = $region16
      $region15: #{down_scale.2} parent=11 // pred_region
        _
      $region16: #{down_scale.2} parent=11 // pred_fallthru
        _
    $region12: #{down_scale.2} parent=5 // pred_fallthru
      _
    %p126 = scmp.lt.s32.totalorder %s9, 2
    // Predicated region
    $region17: #{down_scale.2} parent=5 // pred_check
      %p127 = pneg %p126
    $region18: #{down_scale.2} parent=5 // pred_check_branch
      %129 = sbr.rel (%p127) target = $region20
    $region19: #{down_scale.2} parent=5 // pred_region
      // Predicated region
      $region21: #{down_scale.2} parent=19 // pred_check
        %p130 = pneg %p50
      $region22: #{down_scale.2} parent=19 // pred_check_branch
        %132 = sbr.rel (%p130) target = $region24
      $region23: #{down_scale.2} parent=19 // pred_region
        %p133 = scmp.lt.s32.totalorder %s9, 1
        %s134 = scalar_select %p133, %s9, 1
        %s135 = smul.addr %s134, 8
        %s136 = scalar_lea.vmem %s1, %s135
      $region24: #{down_scale.2} parent=19 // pred_fallthru
        _
      // Predicated region
      $region25: #{down_scale.2} parent=19 // pred_check
        %p137 = pneg %p76
      $region26: #{down_scale.2} parent=19 // pred_check_branch
        %139 = sbr.rel (%p137) target = $region28
      $region27: #{down_scale.2} parent=19 // pred_region
        %p140 = scmp.lt.s32.totalorder %s9, 1
        %s141 = scalar_select %p140, %s9, 1
        %s142 = smul.addr %s141, 8
        %s143 = scalar_lea.vmem %s2, %s142
      $region28: #{down_scale.2} parent=19 // pred_fallthru
        _
    $region20: #{down_scale.2} parent=5 // pred_fallthru
      _
    %p144 = scmp.le.s32.totalorder 1, %s9
    %p145 = scmp.lt.s32.totalorder %s9, 3
    %p146 = pnand %p144, %p145
    %p147 = pneg %p146
    // Predicated region
    $region29: #{down_scale.2} parent=5 // pred_check
      _
    $region30: #{down_scale.2} parent=5 // pred_check_branch
      %149 = sbr.rel (%p146) target = $region32
    $region31: #{down_scale.2} parent=5 // pred_region
      %s150 = ssub.s32 %s9, 1
      %p151 = pneg %p30
      %p152 = pneg %p27
      %p153 = scmp.lt.s32.totalorder %s14, 1
      %s154 = scalar_select %p153, %s14, 1
      %s155 = smul.addr %s154, 8
      %s156 = scalar_lea.vmem %s1, %s155
      %p157 = pneg %p56
      %p158 = pneg %p53
      %p159 = scmp.lt.s32.totalorder %s14, 1
      %s160 = scalar_select %p159, %s14, 1
      %s161 = smul.addr %s160, 8
      %s162 = scalar_lea.vmem %s2, %s161
      %p163 = pneg %p82
      %p164 = pneg %p79
      %p165 = pneg %p108
      %p166 = pneg %p105
      %p167 = scmp.lt.s32.totalorder %s14, 1
      %s168 = scalar_select %p167, %s14, 1
      %s169 = smul.addr %s168, 8
      %s170 = scalar_lea.vmem %s3, %s169
      %p171 = scmp.lt.s32.totalorder %s14, 1
      %s172 = scalar_select %p171, %s14, 1
      %s173 = smul.addr %s172, 8
      %s174 = scalar_lea.vmem %s1, %s173
      %p175 = scmp.lt.s32.totalorder %s14, 1
      %s176 = scalar_select %p175, %s14, 1
      %s177 = smul.addr %s176, 8
      %s178 = scalar_lea.vmem %s2, %s177
      %p179 = scmp.lt.s32.totalorder %s14, 1
      %s180 = scalar_select %p179, %s14, 1
      %s181 = smul.addr %s180, 8
      %s182 = scalar_lea.vmem %s3, %s181
      %v183 = vld [vmem:[%s174] sm:$0xff]
      %v184 = vld [vmem:[%s0] sm:$0xf]
      %186 = vrot.lane.b32.xlu0 %v183, 124
      %v187 = vpop.permute.xlu0 %186
      %189 = vrot.lane.b32.xlu0 %v184, 126
      %v190 = vpop.permute.xlu0 %189
      %vm191 = vcmask 31744
      %v192 = vsel %vm191, %v187, 0
      %vm194 = vcmask 1043456
      %v195 = vsel %vm194, %v190, 0
      %197 = vmatprep.subr.mxu0 0.0
      %198 = vmatpush1.msra.mxu0 %v195
      %199 = vmatprep.subr.mxu0 0.0
      %200 = vmatpush1.msra.mxu0 0.0
      %201 = vmatprep.subr.mxu0 0.0
      %202 = vmatpush1.msra.mxu0 0.0
      %203 = vmatprep.subr.mxu0 0.0
      %204 = vmatpush1.msra.mxu0 0.0
      %205 = vmatprep.subr.mxu0 0.0
      %206 = vmatpush1.msra.mxu0 0.0
      %207 = vmatprep.subr.mxu0 0.0
      %208 = vmatpush1.msra.mxu0 0.0
      %209 = vmatprep.subr.mxu0 0.0
      %210 = vmatpush1.msra.mxu0 0.0
      %211 = vmatprep.subr.mxu0 0.0
      %212 = vmatpush1.msra.mxu0 0.0
      %213 = vmatprep.subr.mxu0 0.0
      %214 = vmatpush1.msra.mxu0 0.0
      %215 = vmatprep.subr.mxu0 0.0
      %216 = vmatpush1.msra.mxu0 0.0
      %217 = vmatprep.subr.mxu0 0.0
      %218 = vmatpush1.msra.mxu0 0.0
      %219 = vmatprep.subr.mxu0 0.0
      %220 = vmatpush1.msra.mxu0 0.0
      %221 = vmatprep.subr.mxu0 0.0
      %222 = vmatpush1.msra.mxu0 0.0
      %223 = vmatprep.subr.mxu0 0.0
      %224 = vmatpush1.msra.mxu0 0.0
      %225 = vmatprep.subr.mxu0 0.0
      %226 = vmatpush1.msra.mxu0 0.0
      %227 = vmatprep.subr.mxu0 0.0
      %228 = vmatpush1.msra.mxu0 0.0
      %229 = vmatprep.subr.mxu0 0.0
      %230 = vmatpush1.msra.mxu0 0.0
      %231 = vmatprep.subr.mxu0 0.0
      %232 = vmatpush1.msra.mxu0 0.0
      %233 = vmatprep.subr.mxu0 0.0
      %234 = vmatpush1.msra.mxu0 0.0
      %235 = vmatprep.subr.mxu0 0.0
      %236 = vmatpush1.msra.mxu0 0.0
      %237 = vmatprep.subr.mxu0 0.0
      %238 = vmatpush1.msra.mxu0 0.0
      %239 = vmatprep.subr.mxu0 0.0
      %240 = vmatpush1.msra.mxu0 0.0
      %241 = vmatprep.subr.mxu0 0.0
      %242 = vmatpush1.msra.mxu0 0.0
      %243 = vmatprep.subr.mxu0 0.0
      %244 = vmatpush1.msra.mxu0 0.0
      %245 = vmatprep.subr.mxu0 0.0
      %246 = vmatpush1.msra.mxu0 0.0
      %247 = vmatprep.subr.mxu0 0.0
      %248 = vmatpush1.msra.mxu0 0.0
      %249 = vmatprep.subr.mxu0 0.0
      %250 = vmatpush1.msra.mxu0 0.0
      %251 = vmatprep.subr.mxu0 0.0
      %252 = vmatpush1.msra.mxu0 0.0
      %253 = vmatprep.subr.mxu0 0.0
      %254 = vmatpush1.msra.mxu0 0.0
      %255 = vmatprep.subr.mxu0 0.0
      %256 = vmatpush1.msra.mxu0 0.0
      %257 = vmatprep.subr.mxu0 0.0
      %258 = vmatpush1.msra.mxu0 0.0
      %259 = vmatprep.subr.mxu0 0.0
      %260 = vmatpush1.msra.mxu0 0.0
      %261 = vmatprep.mubr.f32.mxu0 0.0
      %262 = vmatmul.mubr.f32.gmra.mrb[0].mxu0 %v192
      %v263 = vpop.f32.mrb[0].mxu0
      %v264 = vadd.f32 0.0, %v263
      %v265 = vpop.f32.mrb[0].mxu0
      %266 = vdwg.mxu0
      %v267 = vsel %vm191, %v183, 0
      %v269 = vsel %vm194, %v184, 0
      %271 = vmatprep.subr.mxu0 0.0
      %272 = vmatpush1.msra.mxu0 %v269
      %273 = vmatprep.subr.mxu0 0.0
      %274 = vmatpush1.msra.mxu0 0.0
      %275 = vmatprep.subr.mxu0 0.0
      %276 = vmatpush1.msra.mxu0 0.0
      %277 = vmatprep.subr.mxu0 0.0
      %278 = vmatpush1.msra.mxu0 0.0
      %279 = vmatprep.subr.mxu0 0.0
      %280 = vmatpush1.msra.mxu0 0.0
      %281 = vmatprep.subr.mxu0 0.0
      %282 = vmatpush1.msra.mxu0 0.0
      %283 = vmatprep.subr.mxu0 0.0
      %284 = vmatpush1.msra.mxu0 0.0
      %285 = vmatprep.subr.mxu0 0.0
      %286 = vmatpush1.msra.mxu0 0.0
      %287 = vmatprep.subr.mxu0 0.0
      %288 = vmatpush1.msra.mxu0 0.0
      %289 = vmatprep.subr.mxu0 0.0
      %290 = vmatpush1.msra.mxu0 0.0
      %291 = vmatprep.subr.mxu0 0.0
      %292 = vmatpush1.msra.mxu0 0.0
      %293 = vmatprep.subr.mxu0 0.0
      %294 = vmatpush1.msra.mxu0 0.0
      %295 = vmatprep.subr.mxu0 0.0
      %296 = vmatpush1.msra.mxu0 0.0
      %297 = vmatprep.subr.mxu0 0.0
      %298 = vmatpush1.msra.mxu0 0.0
      %299 = vmatprep.subr.mxu0 0.0
      %300 = vmatpush1.msra.mxu0 0.0
      %301 = vmatprep.subr.mxu0 0.0
      %302 = vmatpush1.msra.mxu0 0.0
      %303 = vmatprep.subr.mxu0 0.0
      %304 = vmatpush1.msra.mxu0 0.0
      %305 = vmatprep.subr.mxu0 0.0
      %306 = vmatpush1.msra.mxu0 0.0
      %307 = vmatprep.subr.mxu0 0.0
      %308 = vmatpush1.msra.mxu0 0.0
      %309 = vmatprep.subr.mxu0 0.0
      %310 = vmatpush1.msra.mxu0 0.0
      %311 = vmatprep.subr.mxu0 0.0
      %312 = vmatpush1.msra.mxu0 0.0
      %313 = vmatprep.subr.mxu0 0.0
      %314 = vmatpush1.msra.mxu0 0.0
      %315 = vmatprep.subr.mxu0 0.0
      %316 = vmatpush1.msra.mxu0 0.0
      %317 = vmatprep.subr.mxu0 0.0
      %318 = vmatpush1.msra.mxu0 0.0
      %319 = vmatprep.subr.mxu0 0.0
      %320 = vmatpush1.msra.mxu0 0.0
      %321 = vmatprep.subr.mxu0 0.0
      %322 = vmatpush1.msra.mxu0 0.0
      %323 = vmatprep.subr.mxu0 0.0
      %324 = vmatpush1.msra.mxu0 0.0
      %325 = vmatprep.subr.mxu0 0.0
      %326 = vmatpush1.msra.mxu0 0.0
      %327 = vmatprep.subr.mxu0 0.0
      %328 = vmatpush1.msra.mxu0 0.0
      %329 = vmatprep.subr.mxu0 0.0
      %330 = vmatpush1.msra.mxu0 0.0
      %331 = vmatprep.subr.mxu0 0.0
      %332 = vmatpush1.msra.mxu0 0.0
      %333 = vmatprep.subr.mxu0 0.0
      %334 = vmatpush1.msra.mxu0 0.0
      %335 = vmatprep.mubr.f32.mxu0 0.0
      %336 = vmatmul.mubr.f32.gmra.mrb[0].mxu0 %v267
      %v337 = vpop.f32.mrb[0].mxu0
      %v338 = vadd.f32 %v264, %v337
      %v339 = vpop.f32.mrb[0].mxu0
      %340 = vdwg.mxu0
      %341 = vrot.lane.b32.xlu0 %v183, 120
      %v342 = vpop.permute.xlu0 %341
      %343 = vrot.lane.b32.xlu0 %v184, 124
      %v344 = vpop.permute.xlu0 %343
      %v345 = vsel %vm191, %v342, 0
      %v347 = vsel %vm194, %v344, 0
      %349 = vmatprep.subr.mxu0 0.0
      %350 = vmatpush1.msra.mxu0 %v347
      %351 = vmatprep.subr.mxu0 0.0
      %352 = vmatpush1.msra.mxu0 0.0
      %353 = vmatprep.subr.mxu0 0.0
      %354 = vmatpush1.msra.mxu0 0.0
      %355 = vmatprep.subr.mxu0 0.0
      %356 = vmatpush1.msra.mxu0 0.0
      %357 = vmatprep.subr.mxu0 0.0
      %358 = vmatpush1.msra.mxu0 0.0
      %359 = vmatprep.subr.mxu0 0.0
      %360 = vmatpush1.msra.mxu0 0.0
      %361 = vmatprep.subr.mxu0 0.0
      %362 = vmatpush1.msra.mxu0 0.0
      %363 = vmatprep.subr.mxu0 0.0
      %364 = vmatpush1.msra.mxu0 0.0
      %365 = vmatprep.subr.mxu0 0.0
      %366 = vmatpush1.msra.mxu0 0.0
      %367 = vmatprep.subr.mxu0 0.0
      %368 = vmatpush1.msra.mxu0 0.0
      %369 = vmatprep.subr.mxu0 0.0
      %370 = vmatpush1.msra.mxu0 0.0
      %371 = vmatprep.subr.mxu0 0.0
      %372 = vmatpush1.msra.mxu0 0.0
      %373 = vmatprep.subr.mxu0 0.0
      %374 = vmatpush1.msra.mxu0 0.0
      %375 = vmatprep.subr.mxu0 0.0
      %376 = vmatpush1.msra.mxu0 0.0
      %377 = vmatprep.subr.mxu0 0.0
      %378 = vmatpush1.msra.mxu0 0.0
      %379 = vmatprep.subr.mxu0 0.0
      %380 = vmatpush1.msra.mxu0 0.0
      %381 = vmatprep.subr.mxu0 0.0
      %382 = vmatpush1.msra.mxu0 0.0
      %383 = vmatprep.subr.mxu0 0.0
      %384 = vmatpush1.msra.mxu0 0.0
      %385 = vmatprep.subr.mxu0 0.0
      %386 = vmatpush1.msra.mxu0 0.0
      %387 = vmatprep.subr.mxu0 0.0
      %388 = vmatpush1.msra.mxu0 0.0
      %389 = vmatprep.subr.mxu0 0.0
      %390 = vmatpush1.msra.mxu0 0.0
      %391 = vmatprep.subr.mxu0 0.0
      %392 = vmatpush1.msra.mxu0 0.0
      %393 = vmatprep.subr.mxu0 0.0
      %394 = vmatpush1.msra.mxu0 0.0
      %395 = vmatprep.subr.mxu0 0.0
      %396 = vmatpush1.msra.mxu0 0.0
      %397 = vmatprep.subr.mxu0 0.0
      %398 = vmatpush1.msra.mxu0 0.0
      %399 = vmatprep.subr.mxu0 0.0
      %400 = vmatpush1.msra.mxu0 0.0
      %401 = vmatprep.subr.mxu0 0.0
      %402 = vmatpush1.msra.mxu0 0.0
      %403 = vmatprep.subr.mxu0 0.0
      %404 = vmatpush1.msra.mxu0 0.0
      %405 = vmatprep.subr.mxu0 0.0
      %406 = vmatpush1.msra.mxu0 0.0
      %407 = vmatprep.subr.mxu0 0.0
      %408 = vmatpush1.msra.mxu0 0.0
      %409 = vmatprep.subr.mxu0 0.0
      %410 = vmatpush1.msra.mxu0 0.0
      %411 = vmatprep.subr.mxu0 0.0
      %412 = vmatpush1.msra.mxu0 0.0
      %413 = vmatprep.mubr.f32.mxu0 0.0
      %414 = vmatmul.mubr.f32.gmra.mrb[0].mxu0 %v345
      %v415 = vpop.f32.mrb[0].mxu0
      %v416 = vadd.f32 0.0, %v415
      %v417 = vpop.f32.mrb[0].mxu0
      %418 = vdwg.mxu0
      %v419 = vadd.f32 %v338, %v416
      %vm420 = vcmask 97280
      %v421 = vsel %vm420, %v419, 0.0
      %422 = vadd.xlane.f32.xlu0 %v421
      %v423 = vpop.xlane.xlu0 %422
      %v424 = vmul.f32 %v423, 0.083333336
      %v425 = vmul.f32 %v419, %v419
      %v426 = vsel %vm420, %v425, 0.0
      %427 = vadd.xlane.f32.xlu0 %v426
      %v428 = vpop.xlane.xlu0 %427
      %v429 = vmul.f32 %v428, 0.083333336
      %v430 = vmul.f32 %v424, %v424
      %v431 = vsub.f32 %v429, %v430
      %v432 = vmax.f32 %v431, 0.0
      %v433 = vld [vmem:[%s178] sm:$0xff]
      %v434 = vadd.f32 %v432, 1e-05
      %v435 = vrsqrt.pop %v434
      %v436 = vmul.f32 %v433, %v435
      %v437 = vmul.f32 %v424, %v436
      %439 = vrot.lane.b32.xlu0 %v437, 1
      %v440 = vpop.permute.xlu0 %439
      %v442 = vsub.f32 %v433, %v440
      %444 = vset.pattern.permute.xlu0 0
      %445 = vperm.xlu0 %444, %v436
      %v446 = vpop.permute.xlu0 %445
      %v448 = vmul.f32 %v419, %v446
      %450 = vset.pattern.permute.xlu0 1
      %451 = vperm.xlu0 %450, %v442
      %v452 = vpop.permute.xlu0 %451
      %v454 = vadd.f32 %v448, %v452
      %v455 = vmul.f32 %v454, 0.18181819
      %v456 = vmax.f32 %v454, %v455
      %457 = vst.msk [vmem:[%s182] sm:$0xff] %vm420, %v456
      %p458 = scmp.lt.s32.totalorder %s14, 1
      %s459 = scalar_select %p458, %s14, 1
      %s460 = smul.addr %s459, 8
      %s461 = scalar_lea.vmem %s3, %s460
      // Predicated region
      $region33: #{down_scale.2} parent=31 // pred_check
        %p462 = pneg %p105
      $region34: #{down_scale.2} parent=31 // pred_check_branch
        %464 = sbr.rel (%p462) target = $region36
      $region35: #{down_scale.2} parent=31 // pred_region
        _
      $region36: #{down_scale.2} parent=31 // pred_fallthru
        _
    $region32: #{down_scale.2} parent=5 // pred_fallthru
      _
    %p465 = scmp.le.s32.totalorder 2, %s9
    // Predicated region
    $region37: #{down_scale.2} parent=5 // pred_check
      %p466 = pneg %p465
    $region38: #{down_scale.2} parent=5 // pred_check_branch
      %468 = sbr.rel (%p466) target = $region40
    $region39: #{down_scale.2} parent=5 // pred_region
      %s469 = ssub.s32 %s9, 2
      // Predicated region
      $region41: #{down_scale.2} parent=39 // pred_check
        %p470 = pneg %p111
      $region42: #{down_scale.2} parent=39 // pred_check_branch
        %472 = sbr.rel (%p470) target = $region44
      $region43: #{down_scale.2} parent=39 // pred_region
        %p473 = scmp.lt.s32.totalorder %s15, 1
        %s474 = scalar_select %p473, %s15, 1
        %s475 = smul.addr %s474, 8
        %s476 = scalar_lea.vmem %s3, %s475
      $region44: #{down_scale.2} parent=39 // pred_fallthru
        _
    $region40: #{down_scale.2} parent=5 // pred_fallthru
      _
  $region6: #{down_scale.2} parent=0 // loop_footer
    %s13 = sadd.s32 1, %s9
  $region7: #{down_scale.2} parent=0 // loop_footer_branch
    %8 = sbr.rel target = $region3
  $region8: #{down_scale.2} parent=0 // loop_exit
    _

</llo_original>
